<compile_context>
chip_gen: v5e
topology: v5e:2x2
jax: 0.10.0
libtpu: 0.0.40
codegen_flags: <defaults>
</compile_context>

<pallas_src>
import jax
import jax.numpy as jnp
import numpy as np
from jax.experimental import pallas as pl
from jax.experimental.pallas import tpu as pltpu


# ----------------------------- Pallas kernel --------------------------------
def fused_kernel(x_ref, w_ref, b_ref, out_ref):
    # x: (N, F) f32,  w: (F, OUT_PAD) bf16/f32,  b: (1, OUT_PAD) f32
    # Padded lanes of b are -1e30, so their logits underflow to 0 in exp().
    x = x_ref[...].astype(w_ref.dtype)          # in-kernel cast (hidden under DMA)
    logits = jnp.dot(x, w_ref[...],
                     preferred_element_type=jnp.float32) + b_ref[...]
    m = jnp.max(logits, axis=1, keepdims=True)
    e = jnp.exp(logits - m)                     # padded lanes -> exp(~-1e30) == 0
    denom = jnp.sum(e, axis=1, keepdims=True)
    # divide -> EUP approx reciprocal + vmul (keeps the VALU free)
    out_ref[...] = e * pl.reciprocal(denom, approx=True)


# ------------------------- offline weight folding ----------------------------
def fold_weights(w_conv, b_conv, w_fc, b_fc, C, H, W, *, stride=2, pad=1):
    """Fold conv -> spatial-mean -> concat -> fc into one (F, OUT) affine map."""
    CO, _, KH, KW = w_conv.shape
    OUT = w_fc.shape[0]
    F = C * H * W
    Ho = (H + 2 * pad - KH) // stride + 1
    Wo = (W + 2 * pad - KW) // stride + 1
    P = Ho * Wo

    w0t = w_fc[:, :F].T                                   # (F, OUT)  flatten part
    w1t = w_fc[:, F:].T                                   # (CO, OUT) pooled-conv part
    wcv1 = w_conv.reshape(CO, C * KH * KW).T @ w1t        # (C*KH*KW, OUT)

    # Asp[(kh,kw), i, j]: how often input pixel (i,j) is touched by tap (kh,kw)
    # over all output positions (0 or 1 here), normalized by P (the mean).
    Asp = np.zeros((KH * KW, H, W), dtype=np.float32)
    for kh in range(KH):
        for kw in range(KW):
            for oh in range(Ho):
                i = stride * oh + kh - pad
                if 0 <= i < H:
                    for ow in range(Wo):
                        j = stride * ow + kw - pad
                        if 0 <= j < W:
                            Asp[kh * KW + kw, i, j] += 1.0
    Asp = jnp.asarray(Asp.reshape(KH * KW, H * W) / P)    # (KH*KW, H*W)

    wcv1_r = wcv1.reshape(C, KH * KW, OUT)
    w_fold = jnp.einsum('ks,cko->cso', Asp, wcv1_r).reshape(F, OUT)
    w_eff = w0t + w_fold                                  # (F, OUT)
    b_eff = b_conv @ w1t + b_fc                           # (OUT,)
    return w_eff, b_eff


# ------------------------ one-time parameter prep ----------------------------
def prepare_params(w_conv, b_conv, w_fc, b_fc, C, H, W,
                   *, compute_dtype=jnp.bfloat16):
    """Fold + lane-pad + cast ONCE at init; padded bias lanes carry -1e30."""
    OUT = w_fc.shape[0]
    OUT_PAD = ((OUT + 127) // 128) * 128                  # lane-dense output slab

    w_eff, b_eff = fold_weights(w_conv, b_conv, w_fc, b_fc, C, H, W)
    w_pad = jnp.pad(w_eff, ((0, 0), (0, OUT_PAD - OUT))).astype(compute_dtype)
    # Bias stays f32 (a -1e30 pad in bf16 would overflow to -inf -> NaN risk).
    b_pad = jnp.pad(b_eff.reshape(1, OUT).astype(jnp.float32),
                    ((0, 0), (0, OUT_PAD - OUT)),
                    constant_values=jnp.float32(-1e30))
    return jax.block_until_ready(w_pad), jax.block_until_ready(b_pad), OUT


# ------------------------------- JAX wrapper ----------------------------------
def model_forward(x, w_pad, b_pad, out_valid):
    """Per-call path: reshape x + one pallas_call; all weight prep is hoisted."""
    N = x.shape[0]
    F = x.shape[1] * x.shape[2] * x.shape[3]
    OUT_PAD = w_pad.shape[1]

    x_flat = x.reshape(N, F)                              # torch.flatten(x, 1), f32

    out = pl.pallas_call(
        fused_kernel,
        out_shape=jax.ShapeDtypeStruct((N, OUT_PAD), jnp.float32),
        in_specs=[pl.BlockSpec(memory_space=pltpu.MemorySpace.VMEM)] * 3,
        out_specs=pl.BlockSpec(memory_space=pltpu.MemorySpace.VMEM),
    )(x_flat, w_pad, b_pad)
    return out[:, :out_valid]


def model_forward_reference(x, w_conv, b_conv, w_fc, b_fc):
    """Pure-JAX reference mirroring the PyTorch forward."""
    N = x.shape[0]
    v0 = x.reshape(N, -1)
    v1 = jax.lax.conv_general_dilated(
        x, w_conv, window_strides=(2, 2), padding=((1, 1), (1, 1)),
        dimension_numbers=('NCHW', 'OIHW', 'NCHW')) + b_conv[None, :, None, None]
    v2 = v1.mean(axis=(2, 3))
    v3 = jnp.concatenate([v0, v2], axis=1)
    v4 = v3 @ w_fc.T + b_fc
    return jax.nn.softmax(v4, axis=1)


# --------------------------------- main --------------------------------------
if __name__ == "__main__":
    N, C, H, W = 2, 3, 16, 16
    CO, KH, KW = 16, 3, 3
    OUT = 10
    F = C * H * W                      # 768
    IN_FEATURES = F + CO               # 784 (in_features the forward requires)

    key = jax.random.PRNGKey(0)
    k0, k1, k2, k3, k4 = jax.random.split(key, 5)

    x = jax.random.normal(k0, (N, C, H, W), dtype=jnp.float32)

    conv_bound = 1.0 / np.sqrt(C * KH * KW)
    w_conv = jax.random.uniform(k1, (CO, C, KH, KW), jnp.float32,
                                -conv_bound, conv_bound)
    b_conv = jax.random.uniform(k2, (CO,), jnp.float32, -conv_bound, conv_bound)

    fc_bound = 1.0 / np.sqrt(IN_FEATURES)
    w_fc = jax.random.uniform(k3, (OUT, IN_FEATURES), jnp.float32,
                              -fc_bound, fc_bound)
    b_fc = jax.random.uniform(k4, (OUT,), jnp.float32, -fc_bound, fc_bound)

    ref = jax.block_until_ready(
        model_forward_reference(x, w_conv, b_conv, w_fc, b_fc))

    # f32 weights: tight check of the folded-affine construction.
    w_pad_f32, b_pad_f32, out_valid = prepare_params(
        w_conv, b_conv, w_fc, b_fc, C, H, W, compute_dtype=jnp.float32)
    out_f32 = jax.block_until_ready(
        model_forward(x, w_pad_f32, b_pad_f32, out_valid))
    np.testing.assert_allclose(np.asarray(out_f32), np.asarray(ref),
                               rtol=2e-3, atol=1e-5)

    # bf16 weights (f32 accumulation, x cast in-kernel): production path.
    w_pad_bf16, b_pad_bf16, out_valid = prepare_params(
        w_conv, b_conv, w_fc, b_fc, C, H, W, compute_dtype=jnp.bfloat16)
    out_bf16 = jax.block_until_ready(
        model_forward(x, w_pad_bf16, b_pad_bf16, out_valid))
    np.testing.assert_allclose(np.asarray(out_bf16), np.asarray(ref),
                               rtol=3e-2, atol=3e-4)

    print("KERNEL_OK")
</pallas_src>

<mosaic_0001>
module attributes {stable_mosaic.version = 11 : i64} {
  func.func @fused_kernel(%arg0: memref<2x768xf32, #tpu.memory_space<vmem>>, %arg1: memref<768x128xf32, #tpu.memory_space<vmem>>, %arg2: memref<1x128xf32, #tpu.memory_space<vmem>>, %arg3: memref<2x128xf32, #tpu.memory_space<vmem>>) attributes {dimension_semantics = [], scalar_prefetch = 0 : i64, scratch_operands = 0 : i64, tpu.core_type = #tpu.core_type<tc>} {
    %c0 = arith.constant 0 : index
    %c0_0 = arith.constant 0 : index
    %0 = vector.load %arg0[%c0, %c0_0] : memref<2x768xf32, #tpu.memory_space<vmem>>, vector<2x768xf32>
    %c0_1 = arith.constant 0 : index
    %c0_2 = arith.constant 0 : index
    %1 = vector.load %arg1[%c0_1, %c0_2] : memref<768x128xf32, #tpu.memory_space<vmem>>, vector<768x128xf32>
    %cst = arith.constant dense<0.000000e+00> : vector<2x128xf32>
    %2 = tpu.matmul %0, %1, %cst {dimension_numbers = #tpu.dot_dimension_numbers<[1], [0], [0], [1], [0, 0, 1, 1], [], []>} : vector<2x768xf32>, vector<768x128xf32>, vector<2x128xf32> -> vector<2x128xf32>
    %c0_3 = arith.constant 0 : index
    %c0_4 = arith.constant 0 : index
    %3 = vector.load %arg2[%c0_3, %c0_4] : memref<1x128xf32, #tpu.memory_space<vmem>>, vector<1x128xf32>
    %4 = vector.broadcast %3 : vector<1x128xf32> to vector<2x128xf32>
    %5 = arith.addf %2, %4 : vector<2x128xf32>
    %cst_5 = arith.constant dense<0xFF800000> : vector<2xf32>
    %6 = vector.multi_reduction <maximumf>, %5, %cst_5 [1] : vector<2x128xf32> to vector<2xf32>
    %7 = vector.shape_cast %6 : vector<2xf32> to vector<2x1xf32>
    %8 = vector.broadcast %7 : vector<2x1xf32> to vector<2x128xf32>
    %9 = arith.subf %5, %8 : vector<2x128xf32>
    %10 = math.exp %9 : vector<2x128xf32>
    %cst_6 = arith.constant dense<0.000000e+00> : vector<2xf32>
    %11 = vector.multi_reduction <add>, %10, %cst_6 [1] : vector<2x128xf32> to vector<2xf32>
    %12 = vector.shape_cast %11 : vector<2xf32> to vector<2x1xf32>
    %13 = tpu.reciprocal %12 {approx = true} : vector<2x1xf32> -> vector<2x1xf32>
    %14 = vector.broadcast %13 : vector<2x1xf32> to vector<2x128xf32>
    %15 = arith.mulf %10, %14 : vector<2x128xf32>
    %c0_7 = arith.constant 0 : index
    %c0_8 = arith.constant 0 : index
    %16 = vector.load %arg3[%c0_7, %c0_8] : memref<2x128xf32, #tpu.memory_space<vmem>>, vector<2x128xf32>
    tpu.vector_store %arg3[%c0_7, %c0_8], %15 {strides = array<i32>} : memref<2x128xf32, #tpu.memory_space<vmem>>, vector<2x128xf32>,
    return
  }
}

</mosaic_0001>

<llo_original>
// kernel: tpu_custom_call.1
$region0: #{tpu_custom_call.1}
  #allocation0 [shape = 'u32[]', space=smem, size = 0x4, offset = 0x4, fixed_abs, tag = 'smem constant byte address 0x4 - core index']
  #allocation1 [shape = 'u32[72,128]{1,0:T(1,128)}', space=vmem, size = 0x9000, scoped, tag = 'internal scratch']
  %s0 = inlined_call_operand.hbm [shape: f32[2,768], index: 0, kind: input, shape index: {}]
  %s1 = inlined_call_operand.hbm [shape: f32[768,128], index: 1, kind: input, shape index: {}]
  %s2 = inlined_call_operand.vmem [shape: f32[1,128], index: 2, kind: input, shape index: {}]
  %s3 = inlined_call_operand.hbm [shape: f32[2,128], index: 3, kind: output, shape index: {}]
  %s4 = sld [smem:[#allocation0]]
  $region30: #{tpu_custom_call.1} parent=0
    _
  %s6 = ssub.s32 1, %s4
  %s7 = scalar_select 0, %s6, %s4
  $region1: #{tpu_custom_call.1} parent=0
    #allocation2 [shape = 'u8[6144]{0}', space=vmem, size = 0x1800, scoped, tag = 'input window, operand 0, single buffered']
    #allocation3 [shape = 's32[1]{0}', space=sflag, size = 0x4, scoped, tag = 'scoped memory for tpu_custom_call.1']
    #allocation4 [shape = 's32[1]{0}', space=sflag, size = 0x4, scoped, tag = 'scoped memory for tpu_custom_call.1']
    #allocation5 [shape = 'u8[393216]{0}', space=vmem, size = 0x60000, scoped, tag = 'input window, operand 1, single buffered']
    #allocation6 [shape = 's32[1]{0}', space=sflag, size = 0x4, scoped, tag = 'scoped memory for tpu_custom_call.1']
    #allocation7 [shape = 'u8[1024]{0}', space=vmem, size = 0x400, scoped, tag = 'output window, operand 0, single buffered']
    %8 = vsyncpa [#allocation3], 0
    %9 = vsyncpa [#allocation6], 0
    %10 = vsyncpa [#allocation4], 0
    // Predicated region
    $region2: #{tpu_custom_call.1} parent=1 // pred_check
      _
    $region3: #{tpu_custom_call.1} parent=1 // pred_check_branch
      %12 = sbr.rel (0) target = $region5
    $region4: #{tpu_custom_call.1} parent=1 // pred_region
      %14 = vsyncadd [#allocation3], 0
      %s16 = sshll.u32 %s0, 4
      %s17 = int_to_ptr.hbm [resolvable:$true] %s16
      %s18 = sshll.u32 [#allocation2], 4
      %s19 = int_to_ptr.vmem [resolvable:$true] %s18
      %21 = dma.hbm_to_vmem [thread:$0]  %s17, 192, %s19, [#allocation3]
    $region5: #{tpu_custom_call.1} parent=1 // pred_fallthru
      _
    // Predicated region
    $region6: #{tpu_custom_call.1} parent=1 // pred_check
      _
    $region7: #{tpu_custom_call.1} parent=1 // pred_check_branch
      %23 = sbr.rel (0) target = $region9
    $region8: #{tpu_custom_call.1} parent=1 // pred_region
      %25 = vsyncadd [#allocation6], 0
      %s26 = sshll.u32 %s1, 4
      %s27 = int_to_ptr.hbm [resolvable:$true] %s26
      %s28 = sshll.u32 [#allocation5], 4
      %s29 = int_to_ptr.vmem [resolvable:$true] %s28
      %34 = dma.hbm_to_vmem [thread:$0]  %s27, 12288, %s29, [#allocation6], 128, 128, 8
    $region9: #{tpu_custom_call.1} parent=1 // pred_fallthru
      _
    // Predicated region
    $region10: #{tpu_custom_call.1} parent=1 // pred_check
      _
    $region11: #{tpu_custom_call.1} parent=1 // pred_check_branch
      %36 = sbr.rel (0) target = $region13
    $region12: #{tpu_custom_call.1} parent=1 // pred_region
      _
    $region13: #{tpu_custom_call.1} parent=1 // pred_fallthru
      _
    // Predicated region
    $region14: #{tpu_custom_call.1} parent=1 // pred_check
      _
    $region15: #{tpu_custom_call.1} parent=1 // pred_check_branch
      %38 = sbr.rel (0) target = $region17
    $region16: #{tpu_custom_call.1} parent=1 // pred_region
      %40 = dma.done [#allocation3], 192
    $region17: #{tpu_custom_call.1} parent=1 // pred_fallthru
      _
    // Predicated region
    $region18: #{tpu_custom_call.1} parent=1 // pred_check
      _
    $region19: #{tpu_custom_call.1} parent=1 // pred_check_branch
      %42 = sbr.rel (0) target = $region21
    $region20: #{tpu_custom_call.1} parent=1 // pred_region
      %44 = dma.done [#allocation6], 12288
    $region21: #{tpu_custom_call.1} parent=1 // pred_fallthru
      _
    %v45 = vld [vmem:[#allocation2] sm:$0xff]
    %v46 = vld [vmem:[#allocation2 + $0x8] sm:$0xf]
    %v47 = vld [vmem:[#allocation5] sm:$0xff]
    %v48 = vld [vmem:[#allocation5 + $0x8] sm:$0xff]
    %v49 = vld [vmem:[#allocation5 + $0x10] sm:$0xff]
    %v50 = vld [vmem:[#allocation5 + $0x18] sm:$0xff]
    %v51 = vld [vmem:[#allocation5 + $0x20] sm:$0xff]
    %v52 = vld [vmem:[#allocation5 + $0x28] sm:$0xff]
    %v53 = vld [vmem:[#allocation5 + $0x30] sm:$0xff]
    %v54 = vld [vmem:[#allocation5 + $0x38] sm:$0xff]
    %v55 = vld [vmem:[#allocation5 + $0x40] sm:$0xff]
    %v56 = vld [vmem:[#allocation5 + $0x48] sm:$0xff]
    %v57 = vld [vmem:[#allocation5 + $0x50] sm:$0xff]
    %v58 = vld [vmem:[#allocation5 + $0x58] sm:$0xff]
    %v59 = vld [vmem:[#allocation5 + $0x60] sm:$0xff]
    %v60 = vld [vmem:[#allocation5 + $0x68] sm:$0xff]
    %v61 = vld [vmem:[#allocation5 + $0x70] sm:$0xff]
    %v62 = vld [vmem:[#allocation5 + $0x78] sm:$0xff]
    %v63 = vld [vmem:[#allocation5 + $0x80] sm:$0xff]
    %v64 = vld [vmem:[#allocation5 + $0x88] sm:$0xff]
    %v65 = vld [vmem:[#allocation5 + $0x90] sm:$0xff]
    %v66 = vld [vmem:[#allocation5 + $0x98] sm:$0xff]
    %v67 = vld [vmem:[#allocation5 + $0xa0] sm:$0xff]
    %v68 = vld [vmem:[#allocation5 + $0xa8] sm:$0xff]
    %v69 = vld [vmem:[#allocation5 + $0xb0] sm:$0xff]
    %v70 = vld [vmem:[#allocation5 + $0xb8] sm:$0xff]
    %v71 = vld [vmem:[#allocation5 + $0xc0] sm:$0xff]
    %v72 = vld [vmem:[#allocation5 + $0xc8] sm:$0xff]
    %v73 = vld [vmem:[#allocation5 + $0xd0] sm:$0xff]
    %v74 = vld [vmem:[#allocation5 + $0xd8] sm:$0xff]
    %v75 = vld [vmem:[#allocation5 + $0xe0] sm:$0xff]
    %v76 = vld [vmem:[#allocation5 + $0xe8] sm:$0xff]
    %v77 = vld [vmem:[#allocation5 + $0xf0] sm:$0xff]
    %v78 = vld [vmem:[#allocation5 + $0xf8] sm:$0xff]
    %v79 = vld [vmem:[#allocation5 + $0x100] sm:$0xff]
    %v80 = vld [vmem:[#allocation5 + $0x108] sm:$0xff]
    %v81 = vld [vmem:[#allocation5 + $0x110] sm:$0xff]
    %v82 = vld [vmem:[#allocation5 + $0x118] sm:$0xff]
    %v83 = vld [vmem:[#allocation5 + $0x120] sm:$0xff]
    %v84 = vld [vmem:[#allocation5 + $0x128] sm:$0xff]
    %v85 = vld [vmem:[#allocation5 + $0x130] sm:$0xff]
    %v86 = vld [vmem:[#allocation5 + $0x138] sm:$0xff]
    %v87 = vld [vmem:[#allocation5 + $0x140] sm:$0xff]
    %v88 = vld [vmem:[#allocation5 + $0x148] sm:$0xff]
    %v89 = vld [vmem:[#allocation5 + $0x150] sm:$0xff]
    %v90 = vld [vmem:[#allocation5 + $0x158] sm:$0xff]
    %v91 = vld [vmem:[#allocation5 + $0x160] sm:$0xff]
    %v92 = vld [vmem:[#allocation5 + $0x168] sm:$0xff]
    %v93 = vld [vmem:[#allocation5 + $0x170] sm:$0xff]
    %v94 = vld [vmem:[#allocation5 + $0x178] sm:$0xff]
    %v95 = vld [vmem:[#allocation5 + $0x180] sm:$0xff]
    %v96 = vld [vmem:[#allocation5 + $0x188] sm:$0xff]
    %v97 = vld [vmem:[#allocation5 + $0x190] sm:$0xff]
    %v98 = vld [vmem:[#allocation5 + $0x198] sm:$0xff]
    %v99 = vld [vmem:[#allocation5 + $0x1a0] sm:$0xff]
    %v100 = vld [vmem:[#allocation5 + $0x1a8] sm:$0xff]
    %v101 = vld [vmem:[#allocation5 + $0x1b0] sm:$0xff]
    %v102 = vld [vmem:[#allocation5 + $0x1b8] sm:$0xff]
    %v103 = vld [vmem:[#allocation5 + $0x1c0] sm:$0xff]
    %v104 = vld [vmem:[#allocation5 + $0x1c8] sm:$0xff]
    %v105 = vld [vmem:[#allocation5 + $0x1d0] sm:$0xff]
    %v106 = vld [vmem:[#allocation5 + $0x1d8] sm:$0xff]
    %v107 = vld [vmem:[#allocation5 + $0x1e0] sm:$0xff]
    %v108 = vld [vmem:[#allocation5 + $0x1e8] sm:$0xff]
    %v109 = vld [vmem:[#allocation5 + $0x1f0] sm:$0xff]
    %v110 = vld [vmem:[#allocation5 + $0x1f8] sm:$0xff]
    %v111 = vld [vmem:[#allocation5 + $0x200] sm:$0xff]
    %v112 = vld [vmem:[#allocation5 + $0x208] sm:$0xff]
    %v113 = vld [vmem:[#allocation5 + $0x210] sm:$0xff]
    %v114 = vld [vmem:[#allocation5 + $0x218] sm:$0xff]
    %v115 = vld [vmem:[#allocation5 + $0x220] sm:$0xff]
    %v116 = vld [vmem:[#allocation5 + $0x228] sm:$0xff]
    %v117 = vld [vmem:[#allocation5 + $0x230] sm:$0xff]
    %v118 = vld [vmem:[#allocation5 + $0x238] sm:$0xff]
    %v119 = vld [vmem:[#allocation5 + $0x240] sm:$0xff]
    %v120 = vld [vmem:[#allocation5 + $0x248] sm:$0xff]
    %v121 = vld [vmem:[#allocation5 + $0x250] sm:$0xff]
    %v122 = vld [vmem:[#allocation5 + $0x258] sm:$0xff]
    %v123 = vld [vmem:[#allocation5 + $0x260] sm:$0xff]
    %v124 = vld [vmem:[#allocation5 + $0x268] sm:$0xff]
    %v125 = vld [vmem:[#allocation5 + $0x270] sm:$0xff]
    %v126 = vld [vmem:[#allocation5 + $0x278] sm:$0xff]
    %v127 = vld [vmem:[#allocation5 + $0x280] sm:$0xff]
    %v128 = vld [vmem:[#allocation5 + $0x288] sm:$0xff]
    %v129 = vld [vmem:[#allocation5 + $0x290] sm:$0xff]
    %v130 = vld [vmem:[#allocation5 + $0x298] sm:$0xff]
    %v131 = vld [vmem:[#allocation5 + $0x2a0] sm:$0xff]
    %v132 = vld [vmem:[#allocation5 + $0x2a8] sm:$0xff]
    %v133 = vld [vmem:[#allocation5 + $0x2b0] sm:$0xff]
    %v134 = vld [vmem:[#allocation5 + $0x2b8] sm:$0xff]
    %v135 = vld [vmem:[#allocation5 + $0x2c0] sm:$0xff]
    %v136 = vld [vmem:[#allocation5 + $0x2c8] sm:$0xff]
    %v137 = vld [vmem:[#allocation5 + $0x2d0] sm:$0xff]
    %v138 = vld [vmem:[#allocation5 + $0x2d8] sm:$0xff]
    %v139 = vld [vmem:[#allocation5 + $0x2e0] sm:$0xff]
    %v140 = vld [vmem:[#allocation5 + $0x2e8] sm:$0xff]
    %v141 = vld [vmem:[#allocation5 + $0x2f0] sm:$0xff]
    %v142 = vld [vmem:[#allocation5 + $0x2f8] sm:$0xff]
    %v143 = vld [vmem:[%s2] sm:$0x1]
    %v145 = vperm.slane %v143, 0
    %149 = vst [vmem:[#allocation1] ss:$4 sm:$0xff] %v45
    %s150 = scalar_lea.vmem [#allocation1], 32
    %151 = vst [vmem:[%s150] ss:$4 sm:$0xff] %v46
    %v152 = vld.sshfl [vmem:[#allocation1] sm:$0xff pattern:$0x73625140]
    %v153 = vld.sshfl [vmem:[#allocation1 + $0x8] sm:$0xff pattern:$0x73625140]
    %v154 = vld.sshfl [vmem:[#allocation1 + $0x10] sm:$0xff pattern:$0x73625140]
    %v155 = vld.sshfl [vmem:[#allocation1 + $0x18] sm:$0xff pattern:$0x73625140]
    %v156 = vld.sshfl [vmem:[#allocation1 + $0x20] sm:$0xff pattern:$0x73625140]
    %v157 = vld.sshfl [vmem:[#allocation1 + $0x28] sm:$0xff pattern:$0x73625140]
    %164 = vmatpush.msra.mxu0 %v62
    %165 = vmatpush.msra.mxu0 %v61
    %166 = vmatpush.msra.mxu0 %v60
    %167 = vmatpush.msra.mxu0 %v59
    %168 = vmatpush.msra.mxu0 %v58
    %169 = vmatpush.msra.mxu0 %v57
    %170 = vmatpush.msra.mxu0 %v56
    %171 = vmatpush.msra.mxu0 %v55
    %172 = vmatpush.msra.mxu0 %v54
    %173 = vmatpush.msra.mxu0 %v53
    %174 = vmatpush.msra.mxu0 %v52
    %175 = vmatpush.msra.mxu0 %v51
    %176 = vmatpush.msra.mxu0 %v50
    %177 = vmatpush.msra.mxu0 %v49
    %178 = vmatpush.msra.mxu0 %v48
    %179 = vmatpush.msra.mxu0 %v47
    %180 = vmatmul.f32.gmra.mxu0 %v152
    %v181 = vpop.f32.mrf.mxu0
    %v182 = vadd.f32 %v145, %v181
    %183 = vdwg.mxu0
    %184 = vmatpush.msra.mxu0 %v78
    %185 = vmatpush.msra.mxu0 %v77
    %186 = vmatpush.msra.mxu0 %v76
    %187 = vmatpush.msra.mxu0 %v75
    %188 = vmatpush.msra.mxu0 %v74
    %189 = vmatpush.msra.mxu0 %v73
    %190 = vmatpush.msra.mxu0 %v72
    %191 = vmatpush.msra.mxu0 %v71
    %192 = vmatpush.msra.mxu0 %v70
    %193 = vmatpush.msra.mxu0 %v69
    %194 = vmatpush.msra.mxu0 %v68
    %195 = vmatpush.msra.mxu0 %v67
    %196 = vmatpush.msra.mxu0 %v66
    %197 = vmatpush.msra.mxu0 %v65
    %198 = vmatpush.msra.mxu0 %v64
    %199 = vmatpush.msra.mxu0 %v63
    %200 = vmatmul.f32.gmra.mxu0 %v153
    %v201 = vpop.f32.mrf.mxu0
    %v202 = vadd.f32 %v182, %v201
    %203 = vdwg.mxu0
    %204 = vmatpush.msra.mxu0 %v94
    %205 = vmatpush.msra.mxu0 %v93
    %206 = vmatpush.msra.mxu0 %v92
    %207 = vmatpush.msra.mxu0 %v91
    %208 = vmatpush.msra.mxu0 %v90
    %209 = vmatpush.msra.mxu0 %v89
    %210 = vmatpush.msra.mxu0 %v88
    %211 = vmatpush.msra.mxu0 %v87
    %212 = vmatpush.msra.mxu0 %v86
    %213 = vmatpush.msra.mxu0 %v85
    %214 = vmatpush.msra.mxu0 %v84
    %215 = vmatpush.msra.mxu0 %v83
    %216 = vmatpush.msra.mxu0 %v82
    %217 = vmatpush.msra.mxu0 %v81
    %218 = vmatpush.msra.mxu0 %v80
    %219 = vmatpush.msra.mxu0 %v79
    %220 = vmatmul.f32.gmra.mxu0 %v154
    %v221 = vpop.f32.mrf.mxu0
    %v222 = vadd.f32 %v202, %v221
    %223 = vdwg.mxu0
    %224 = vmatpush.msra.mxu0 %v110
    %225 = vmatpush.msra.mxu0 %v109
    %226 = vmatpush.msra.mxu0 %v108
    %227 = vmatpush.msra.mxu0 %v107
    %228 = vmatpush.msra.mxu0 %v106
    %229 = vmatpush.msra.mxu0 %v105
    %230 = vmatpush.msra.mxu0 %v104
    %231 = vmatpush.msra.mxu0 %v103
    %232 = vmatpush.msra.mxu0 %v102
    %233 = vmatpush.msra.mxu0 %v101
    %234 = vmatpush.msra.mxu0 %v100
    %235 = vmatpush.msra.mxu0 %v99
    %236 = vmatpush.msra.mxu0 %v98
    %237 = vmatpush.msra.mxu0 %v97
    %238 = vmatpush.msra.mxu0 %v96
    %239 = vmatpush.msra.mxu0 %v95
    %240 = vmatmul.f32.gmra.mxu0 %v155
    %v241 = vpop.f32.mrf.mxu0
    %v242 = vadd.f32 %v222, %v241
    %243 = vdwg.mxu0
    %244 = vmatpush.msra.mxu0 %v126
    %245 = vmatpush.msra.mxu0 %v125
    %246 = vmatpush.msra.mxu0 %v124
    %247 = vmatpush.msra.mxu0 %v123
    %248 = vmatpush.msra.mxu0 %v122
    %249 = vmatpush.msra.mxu0 %v121
    %250 = vmatpush.msra.mxu0 %v120
    %251 = vmatpush.msra.mxu0 %v119
    %252 = vmatpush.msra.mxu0 %v118
    %253 = vmatpush.msra.mxu0 %v117
    %254 = vmatpush.msra.mxu0 %v116
    %255 = vmatpush.msra.mxu0 %v115
    %256 = vmatpush.msra.mxu0 %v114
    %257 = vmatpush.msra.mxu0 %v113
    %258 = vmatpush.msra.mxu0 %v112
    %259 = vmatpush.msra.mxu0 %v111
    %260 = vmatmul.f32.gmra.mxu0 %v156
    %v261 = vpop.f32.mrf.mxu0
    %v262 = vadd.f32 %v242, %v261
    %263 = vdwg.mxu0
    %264 = vmatpush.msra.mxu0 %v142
    %265 = vmatpush.msra.mxu0 %v141
    %266 = vmatpush.msra.mxu0 %v140
    %267 = vmatpush.msra.mxu0 %v139
    %268 = vmatpush.msra.mxu0 %v138
    %269 = vmatpush.msra.mxu0 %v137
    %270 = vmatpush.msra.mxu0 %v136
    %271 = vmatpush.msra.mxu0 %v135
    %272 = vmatpush.msra.mxu0 %v134
    %273 = vmatpush.msra.mxu0 %v133
    %274 = vmatpush.msra.mxu0 %v132
    %275 = vmatpush.msra.mxu0 %v131
    %276 = vmatpush.msra.mxu0 %v130
    %277 = vmatpush.msra.mxu0 %v129
    %278 = vmatpush.msra.mxu0 %v128
    %279 = vmatpush.msra.mxu0 %v127
    %280 = vmatmul.f32.gmra.mxu0 %v157
    %v281 = vpop.f32.mrf.mxu0
    %v282 = vadd.f32 %v262, %v281
    %283 = vdwg.mxu0
    %vm284 = vcmask 1041408
    %v285 = vsel %vm284, %v282, -inf
    %286 = vmax.xlane.f32.xlu0 %v285
    %v287 = vpop.xlane.xlu0 %286
    %v288 = vsub.f32 %v282, %v287
    %v289 = vmul.f32 %v288, 1.442695
    %v290 = vpow.pop %v289
    %v291 = vsel %vm284, %v290, 0.0
    %292 = vadd.xlane.f32.xlu0 %v291
    %v293 = vpop.xlane.xlu0 %292
    %v294 = vrcp.pop %v293
    %v295 = vmul.f32 %v290, %v294
    %296 = vst [vmem:[#allocation7] sm:$0x3] %v295
    // Predicated region
    $region22: #{tpu_custom_call.1} parent=1 // pred_check
      _
    $region23: #{tpu_custom_call.1} parent=1 // pred_check_branch
      %298 = sbr.rel (0) target = $region25
    $region24: #{tpu_custom_call.1} parent=1 // pred_region
      %300 = vsyncadd [#allocation4], 0
      %s302 = sshll.u32 [#allocation7], 4
      %s303 = int_to_ptr.vmem [resolvable:$true] %s302
      %s304 = sshll.u32 %s3, 4
      %s305 = int_to_ptr.hbm [resolvable:$true] %s304
      %307 = dma.vmem_to_hbm [thread:$0]  %s303, 32, %s305, [#allocation4]
    $region25: #{tpu_custom_call.1} parent=1 // pred_fallthru
      _
    // Predicated region
    $region26: #{tpu_custom_call.1} parent=1 // pred_check
      _
    $region27: #{tpu_custom_call.1} parent=1 // pred_check_branch
      %309 = sbr.rel (0) target = $region29
    $region28: #{tpu_custom_call.1} parent=1 // pred_region
      %311 = dma.done [#allocation4], 32
    $region29: #{tpu_custom_call.1} parent=1 // pred_fallthru
      _
    %312 = vsyncpa [#allocation3], 1
    %313 = vsyncpa [#allocation6], 1
    %314 = vsyncpa [#allocation4], 1

</llo_original>
